<compile_context>
chip_gen: v7x
topology: tpu7x:2x2x1
jax: 0.10.0
libtpu: 0.0.40
codegen_flags: <defaults>
</compile_context>

<pallas_src>
import functools

import jax
import jax.numpy as jnp
import numpy as np
from jax import lax
from jax.experimental import pallas as pl
from jax.experimental.pallas import tpu as pltpu


def _dkwinners_kernel(x_ref, g_ref, o_ref, *, out_dim, dpc):
    """One batch tile: (TB, n) in -> (TB, n) out, vectorized across all neurons.

    g_ref holds a static 0/1 gather matrix of shape (n, dpc*n) such that
      (x @ g)[:, d*n + j] == x[:, (j // dpc) * (dpc - 1) + d]
    i.e. plane d contains, for every output column j, the d-th candidate value
    of the window belonging to column j's neuron.
    """
    x = x_ref[...]                                       # (TB, n)
    n = out_dim * dpc

    # Single MXU matmul builds all dpc window-value planes (lane-dense work).
    v = jnp.dot(x, g_ref[...], preferred_element_type=jnp.float32)  # (TB, dpc*n)

    # Unrolled (value, index) compare chain over the dpc planes.
    # Strict ">" keeps first-index tie-break (matches argmax-first semantics).
    best_val = v[:, 0:n]
    best_idx = jnp.zeros(x.shape, dtype=jnp.int32)
    for d in range(1, dpc):
        plane = v[:, d * n:(d + 1) * n]
        gt = plane > best_val
        best_val = jnp.where(gt, plane, best_val)
        best_idx = jnp.where(gt, d, best_idx)

    # Column j belongs to dendrite position j % dpc of its neuron; the winner
    # index is broadcast across all dpc columns of a neuron by construction.
    d_col = lax.broadcasted_iota(jnp.int32, x.shape, 1) % dpc
    mask = (best_idx == d_col).astype(x.dtype)

    # Single full-width, lane-dense store per tile.
    o_ref[...] = x * mask


def _gather_matrix(out_dim, dpc, dtype):
    """Static 0/1 matrix mapping x columns to the dpc window-value planes."""
    n = out_dim * dpc
    g = np.zeros((n, dpc * n), dtype=np.float32)
    for d in range(dpc):
        for j in range(n):
            src = (j // dpc) * (dpc - 1) + d     # literal (dpc-1) window stride
            g[src, d * n + j] = 1.0
    return jnp.asarray(g, dtype=dtype)


def dkwinners_forward(x, out_dim, dendrites_per_neuron, block_rows=None):
    """Pallas wrapper for DKWinners.forward. x: (batch, out_dim * dpc)."""
    b, n = x.shape
    dpc = dendrites_per_neuron
    assert n == out_dim * dpc, "n must equal out_dim * dendrites_per_neuron"

    if block_rows is None:
        block_rows = 1024
        # Keep double-buffered x/out tiles + gathered planes comfortably inside
        # VMEM (conservative so it also fits v7x's 64 MiB / 32 MiB scoped).
        budget = 16 * 1024 * 1024
        while block_rows > 8 and (
            block_rows * n * x.dtype.itemsize * (4 + 2 * dpc) > budget
        ):
            block_rows //= 2
    tb = min(block_rows, b)
    if tb < b:
        tb = max(8, (tb // 8) * 8)               # sublane-aligned tiles

    g = _gather_matrix(out_dim, dpc, x.dtype)
    kernel = functools.partial(_dkwinners_kernel, out_dim=out_dim, dpc=dpc)

    return pl.pallas_call(
        kernel,
        out_shape=jax.ShapeDtypeStruct((b, n), x.dtype),
        grid=(pl.cdiv(b, tb),),
        in_specs=[
            pl.BlockSpec((tb, n), lambda i: (i, 0)),
            pl.BlockSpec((n, dpc * n), lambda i: (0, 0)),
        ],
        out_specs=pl.BlockSpec((tb, n), lambda i: (i, 0)),
        compiler_params=pltpu.CompilerParams(
            dimension_semantics=("parallel",)),
    )(x, g)


def _ref_forward(x, out_dim, dpc):
    """Pure-JAX reference of the intended semantics (for a correctness check)."""
    b, n = x.shape
    mask = jnp.zeros((b, out_dim, dpc), x.dtype)
    rows = jnp.arange(b)
    for k in range(out_dim):
        ind = jnp.argmax(x[:, k * (dpc - 1):k * (dpc - 1) + dpc], axis=1)
        mask = mask.at[rows, k, ind].set(1.0)
    return mask.reshape(b, out_dim * dpc) * x


if __name__ == "__main__":
    out_dim = 8
    dendrites_per_neuron = 3          # DKWinnersBase default
    n = out_dim * dendrites_per_neuron

    key = jax.random.PRNGKey(0)
    k_small, k_big = jax.random.split(key)

    # Small shape consistent with the module defaults.
    x_small = jax.random.normal(k_small, (2, n), dtype=jnp.float32)
    out_small = dkwinners_forward(x_small, out_dim, dendrites_per_neuron)
    jax.block_until_ready(out_small)
    ref_small = _ref_forward(x_small, out_dim, dendrites_per_neuron)
    assert out_small.shape == (2, n) and out_small.dtype == jnp.float32
    assert jnp.allclose(out_small, ref_small), "Pallas output mismatch vs. reference"

    # Slightly larger batch to exercise the tiled / pipelined grid path.
    x_big = jax.random.normal(k_big, (64, n), dtype=jnp.float32)
    out_big = dkwinners_forward(x_big, out_dim, dendrites_per_neuron, block_rows=16)
    jax.block_until_ready(out_big)
    assert jnp.allclose(out_big, _ref_forward(x_big, out_dim, dendrites_per_neuron)), \
        "Pallas tiled-grid output mismatch vs. reference"

    print("KERNEL_OK")
</pallas_src>

<mosaic_0001>
module attributes {stable_mosaic.version = 11 : i64} {
  func.func @_dkwinners_kernel(%arg0: i32, %arg1: memref<2x24xf32, #tpu.memory_space<vmem>>, %arg2: memref<24x72xf32, #tpu.memory_space<vmem>>, %arg3: memref<2x24xf32, #tpu.memory_space<vmem>>) attributes {dimension_semantics = [#tpu.dimension_semantics<parallel>], iteration_bounds = array<i64: 1>, scalar_prefetch = 0 : i64, scratch_operands = 0 : i64, tpu.core_type = #tpu.core_type<tc>, window_params = [{transform_indices = @transform_0, window_bounds = array<i64: 2, 24>}, {pipeline_mode = #tpu.pipeline_mode<synchronous>, transform_indices = @transform_1, window_bounds = array<i64: 24, 72>}, {transform_indices = @transform_2, window_bounds = array<i64: 2, 24>}]} {
    %c0 = arith.constant 0 : index
    %c0_0 = arith.constant 0 : index
    %0 = vector.load %arg1[%c0, %c0_0] : memref<2x24xf32, #tpu.memory_space<vmem>>, vector<2x24xf32>
    %c0_1 = arith.constant 0 : index
    %c0_2 = arith.constant 0 : index
    %1 = vector.load %arg2[%c0_1, %c0_2] : memref<24x72xf32, #tpu.memory_space<vmem>>, vector<24x72xf32>
    %cst = arith.constant dense<0.000000e+00> : vector<2x72xf32>
    %2 = tpu.matmul %0, %1, %cst {dimension_numbers = #tpu.dot_dimension_numbers<[1], [0], [0], [1], [0, 0, 1, 1], [], []>} : vector<2x24xf32>, vector<24x72xf32>, vector<2x72xf32> -> vector<2x72xf32>
    %3 = vector.extract_strided_slice %2 {offsets = [0, 0], sizes = [2, 24], strides = [1, 1]} : vector<2x72xf32> to vector<2x24xf32>
    %c0_i32 = arith.constant 0 : i32
    %4 = vector.broadcast %c0_i32 : i32 to vector<2x24xi32>
    %5 = vector.extract_strided_slice %2 {offsets = [0, 24], sizes = [2, 24], strides = [1, 1]} : vector<2x72xf32> to vector<2x24xf32>
    %6 = arith.cmpf ogt, %5, %3 : vector<2x24xf32>
    %7 = arith.select %6, %5, %3 : vector<2x24xi1>, vector<2x24xf32>
    %c1_i32 = arith.constant 1 : i32
    %8 = vector.broadcast %c1_i32 : i32 to vector<2x24xi32>
    %9 = arith.select %6, %8, %4 : vector<2x24xi1>, vector<2x24xi32>
    %10 = vector.extract_strided_slice %2 {offsets = [0, 48], sizes = [2, 24], strides = [1, 1]} : vector<2x72xf32> to vector<2x24xf32>
    %11 = arith.cmpf ogt, %10, %7 : vector<2x24xf32>
    %c2_i32 = arith.constant 2 : i32
    %12 = vector.broadcast %c2_i32 : i32 to vector<2x24xi32>
    %13 = arith.select %11, %12, %9 : vector<2x24xi1>, vector<2x24xi32>
    %14 = tpu.iota {dimensions = array<i32: 1>} : vector<2x24xi32>
    %c3_i32 = arith.constant 3 : i32
    %c0_i32_3 = arith.constant 0 : i32
    %15 = arith.cmpi eq, %c3_i32, %c0_i32_3 : i32
    %c1_i32_4 = arith.constant 1 : i32
    %16 = arith.select %15, %c1_i32_4, %c3_i32 : i32
    %17 = vector.broadcast %16 : i32 to vector<2x24xi32>
    %18 = arith.remsi %14, %17 : vector<2x24xi32>
    %c0_i32_5 = arith.constant 0 : i32
    %19 = vector.broadcast %c0_i32_5 : i32 to vector<2x24xi32>
    %20 = arith.cmpi ne, %18, %19 : vector<2x24xi32>
    %c0_i32_6 = arith.constant 0 : i32
    %21 = vector.broadcast %c0_i32_6 : i32 to vector<2x24xi32>
    %22 = arith.cmpi slt, %18, %21 : vector<2x24xi32>
    %c0_i32_7 = arith.constant 0 : i32
    %23 = arith.cmpi slt, %16, %c0_i32_7 : i32
    %24 = vector.broadcast %23 : i1 to vector<2x24xi1>
    %25 = vector.broadcast %24 : vector<2x24xi1> to vector<2x24xi1>
    %26 = arith.xori %22, %25 : vector<2x24xi1>
    %27 = arith.andi %26, %20 : vector<2x24xi1>
    %28 = vector.broadcast %16 : i32 to vector<2x24xi32>
    %29 = arith.addi %18, %28 : vector<2x24xi32>
    %30 = arith.select %27, %29, %18 : vector<2x24xi1>, vector<2x24xi32>
    %31 = arith.cmpi eq, %13, %30 : vector<2x24xi32>
    %32 = arith.extui %31 : vector<2x24xi1> to vector<2x24xi32>
    %33 = arith.sitofp %32 : vector<2x24xi32> to vector<2x24xf32>
    %34 = arith.mulf %0, %33 : vector<2x24xf32>
    %c0_8 = arith.constant 0 : index
    %c0_9 = arith.constant 0 : index
    %35 = vector.load %arg3[%c0_8, %c0_9] : memref<2x24xf32, #tpu.memory_space<vmem>>, vector<2x24xf32>
    tpu.vector_store %arg3[%c0_8, %c0_9], %34 {strides = array<i32>} : memref<2x24xf32, #tpu.memory_space<vmem>>, vector<2x24xf32>,
    return
  }
  func.func @transform_0(%arg0: i32) -> (i32, i32) {
    %c0_i32 = arith.constant 0 : i32
    %c0_i32_0 = arith.constant 0 : i32
    return %arg0, %c0_i32 : i32, i32
  }
  func.func @transform_1(%arg0: i32) -> (i32, i32) {
    %c0_i32 = arith.constant 0 : i32
    %c0_i32_0 = arith.constant 0 : i32
    %c0_i32_1 = arith.constant 0 : i32
    return %c0_i32, %c0_i32_0 : i32, i32
  }
  func.func @transform_2(%arg0: i32) -> (i32, i32) {
    %c0_i32 = arith.constant 0 : i32
    %c0_i32_0 = arith.constant 0 : i32
    return %arg0, %c0_i32 : i32, i32
  }
}

</mosaic_0001>

<llo_original>
// kernel: tpu_custom_call.1
$region0: #{tpu_custom_call.1}
  #allocation0 [shape = 'u32[]', space=smem, size = 0x4, offset = 0x4, fixed_abs, tag = 'smem constant byte address 0x4 - core index']
  #allocation1 [shape = 'u32[144,128]{1,0:T(1,128)}', space=vmem, size = 0x12000, scoped, tag = 'internal scratch']
  %s0 = inlined_call_operand.hbm [shape: f32[2,24], index: 0, kind: input, shape index: {}]
  %s1 = inlined_call_operand.hbm [shape: f32[24,72], index: 1, kind: input, shape index: {}]
  %s2 = inlined_call_operand.hbm [shape: f32[2,24], index: 2, kind: output, shape index: {}]
  %s3 = sld [smem:[#allocation0]]
  $region26: #{tpu_custom_call.1} parent=0
    _
  %s5 = ssub.s32 1, %s3
  %s6 = scalar_select 0, %s5, %s3
  $region1: #{tpu_custom_call.1} parent=0
    #allocation2 [shape = 'u8[1024]{0}', space=vmem, size = 0x400, scoped, tag = 'input window, operand 0, single buffered']
    #allocation3 [shape = 's32[1]{0}', space=sflag, size = 0x4, scoped, tag = 'scoped memory for tpu_custom_call.1']
    #allocation4 [shape = 's32[1]{0}', space=sflag, size = 0x4, scoped, tag = 'scoped memory for tpu_custom_call.1']
    #allocation5 [shape = 'u8[12288]{0}', space=vmem, size = 0x3000, scoped, tag = 'input window, operand 1, single buffered']
    #allocation6 [shape = 's32[1]{0}', space=sflag, size = 0x4, scoped, tag = 'scoped memory for tpu_custom_call.1']
    #allocation7 [shape = 'u8[1024]{0}', space=vmem, size = 0x400, scoped, tag = 'output window, operand 0, single buffered']
    %7 = vsyncpa [#allocation3], 0
    %8 = vsyncpa [#allocation6], 0
    %9 = vsyncpa [#allocation4], 0
    // Predicated region
    $region2: #{tpu_custom_call.1} parent=1 // pred_check
      _
    $region3: #{tpu_custom_call.1} parent=1 // pred_check_branch
      %11 = sbr.rel (0) target = $region5
    $region4: #{tpu_custom_call.1} parent=1 // pred_region
      %s13 = ssub.s32 32, 32
      %14 = vsyncadd [#allocation3], %s13
      %s16 = sshll.u32 [#allocation2], 4
      %s17 = int_to_ptr.vmem [resolvable:$true] %s16
      %19 = dma.hbm_to_vmem [thread:$0]  %s0, 32, %s17, [#allocation3]
    $region5: #{tpu_custom_call.1} parent=1 // pred_fallthru
      _
    // Predicated region
    $region6: #{tpu_custom_call.1} parent=1 // pred_check
      _
    $region7: #{tpu_custom_call.1} parent=1 // pred_check_branch
      %21 = sbr.rel (0) target = $region9
    $region8: #{tpu_custom_call.1} parent=1 // pred_region
      %s23 = ssub.s32 384, 384
      %24 = vsyncadd [#allocation6], %s23
      %s25 = sshll.u32 [#allocation5], 4
      %s26 = int_to_ptr.vmem [resolvable:$true] %s25
      %31 = dma.hbm_to_vmem [thread:$0]  %s1, 384, %s26, [#allocation6], 128, 128, 8
    $region9: #{tpu_custom_call.1} parent=1 // pred_fallthru
      _
    // Predicated region
    $region10: #{tpu_custom_call.1} parent=1 // pred_check
      _
    $region11: #{tpu_custom_call.1} parent=1 // pred_check_branch
      %33 = sbr.rel (0) target = $region13
    $region12: #{tpu_custom_call.1} parent=1 // pred_region
      %34 = dma.done [#allocation3], 32
    $region13: #{tpu_custom_call.1} parent=1 // pred_fallthru
      _
    // Predicated region
    $region14: #{tpu_custom_call.1} parent=1 // pred_check
      _
    $region15: #{tpu_custom_call.1} parent=1 // pred_check_branch
      %36 = sbr.rel (0) target = $region17
    $region16: #{tpu_custom_call.1} parent=1 // pred_region
      %37 = dma.done [#allocation6], 384
    $region17: #{tpu_custom_call.1} parent=1 // pred_fallthru
      _
    %v38 = vld [vmem:[#allocation2] sm:$0x3]
    %v39 = vld [vmem:[#allocation5] sm:$0xff]
    %v40 = vld [vmem:[#allocation5 + $0x8] sm:$0xff]
    %v41 = vld [vmem:[#allocation5 + $0x10] sm:$0xff]
    %vm42 = vcmask 195584
    %v44 = vsel %vm42, %v38, 0
    %46 = vmatprep.subr.mxu0 0.0
    %47 = vmatpush1.msra.mxu0 %v39
    %48 = vmatprep.subr.mxu0 0.0
    %49 = vmatpush1.msra.mxu0 %v40
    %50 = vmatprep.subr.mxu0 0.0
    %51 = vmatpush1.msra.mxu0 %v41
    %52 = vmatprep.subr.mxu0 0.0
    %53 = vmatpush1.msra.mxu0 0.0
    %54 = vmatprep.subr.mxu0 0.0
    %55 = vmatpush1.msra.mxu0 0.0
    %56 = vmatprep.subr.mxu0 0.0
    %57 = vmatpush1.msra.mxu0 0.0
    %58 = vmatprep.subr.mxu0 0.0
    %59 = vmatpush1.msra.mxu0 0.0
    %60 = vmatprep.subr.mxu0 0.0
    %61 = vmatpush1.msra.mxu0 0.0
    %62 = vmatprep.subr.mxu0 0.0
    %63 = vmatpush1.msra.mxu0 0.0
    %64 = vmatprep.subr.mxu0 0.0
    %65 = vmatpush1.msra.mxu0 0.0
    %66 = vmatprep.subr.mxu0 0.0
    %67 = vmatpush1.msra.mxu0 0.0
    %68 = vmatprep.subr.mxu0 0.0
    %69 = vmatpush1.msra.mxu0 0.0
    %70 = vmatprep.subr.mxu0 0.0
    %71 = vmatpush1.msra.mxu0 0.0
    %72 = vmatprep.subr.mxu0 0.0
    %73 = vmatpush1.msra.mxu0 0.0
    %74 = vmatprep.subr.mxu0 0.0
    %75 = vmatpush1.msra.mxu0 0.0
    %76 = vmatprep.subr.mxu0 0.0
    %77 = vmatpush1.msra.mxu0 0.0
    %78 = vmatprep.subr.mxu0 0.0
    %79 = vmatpush1.msra.mxu0 0.0
    %80 = vmatprep.subr.mxu0 0.0
    %81 = vmatpush1.msra.mxu0 0.0
    %82 = vmatprep.subr.mxu0 0.0
    %83 = vmatpush1.msra.mxu0 0.0
    %84 = vmatprep.subr.mxu0 0.0
    %85 = vmatpush1.msra.mxu0 0.0
    %86 = vmatprep.subr.mxu0 0.0
    %87 = vmatpush1.msra.mxu0 0.0
    %88 = vmatprep.subr.mxu0 0.0
    %89 = vmatpush1.msra.mxu0 0.0
    %90 = vmatprep.subr.mxu0 0.0
    %91 = vmatpush1.msra.mxu0 0.0
    %92 = vmatprep.subr.mxu0 0.0
    %93 = vmatpush1.msra.mxu0 0.0
    %94 = vmatprep.subr.mxu0 0.0
    %95 = vmatpush1.msra.mxu0 0.0
    %96 = vmatprep.subr.mxu0 0.0
    %97 = vmatpush1.msra.mxu0 0.0
    %98 = vmatprep.subr.mxu0 0.0
    %99 = vmatpush1.msra.mxu0 0.0
    %100 = vmatprep.subr.mxu0 0.0
    %101 = vmatpush1.msra.mxu0 0.0
    %102 = vmatprep.subr.mxu0 0.0
    %103 = vmatpush1.msra.mxu0 0.0
    %104 = vmatprep.subr.mxu0 0.0
    %105 = vmatpush1.msra.mxu0 0.0
    %106 = vmatprep.subr.mxu0 0.0
    %107 = vmatpush1.msra.mxu0 0.0
    %108 = vmatprep.subr.mxu0 0.0
    %109 = vmatpush1.msra.mxu0 0.0
    %110 = vmatprep.mubr.f32.mxu0 0.0
    %111 = vmatmul.mubr.f32.gmra.mrb[0].mxu0 %v44
    %v112 = vpop.f32.mrb[0].mxu0
    %v113 = vadd.f32 0.0, %v112
    %v114 = vpop.f32.mrb[0].mxu0
    %115 = vdwg.mxu0
    %117 = vrot.lane.b32.xlu0 %v113, 24
    %v118 = vpop.permute.xlu0 %117
    %vm120 = vcmp.gt.f32.partialorder %v113, %v118
    %v121 = vsel %vm120, %v113, %v118
    %v122 = vsel %vm120, 1, 0
    %124 = vrot.lane.b32.xlu0 %v121, 24
    %v125 = vpop.permute.xlu0 %124
    %vm127 = vcmp.gt.f32.partialorder %v113, %v125
    %128 = vrot.lane.b32.xlu0 %v122, 24
    %v129 = vpop.permute.xlu0 %128
    %v130 = vsel %vm127, 2, %v129
    %v131 = vlaneseq
    %v132 = vand.u32 %v131, 127
    %vm133 = vcmp.lt.s32.totalorder %v132, 0
    %v134 = vsub.s32 0, %v132
    %v135 = vsel %vm133, %v134, %v132
    %v136 = vmul.u32.u64.compose %v135, 2863311531
    %v137 = vextract.low.u32 %v136
    %v138 = vextract.high.u32 %v136
    %v139 = vshrl.u32 %v138, 1
    %v140 = vmul.u32 %v139, 3
    %v141 = vsub.s32 %v135, %v140
    %v142 = vsub.s32 0, %v141
    %v143 = vsel %vm133, %v142, %v141
    %vm144 = vcmp.ne.s32.totalorder %v143, 0
    %vm145 = vcmp.lt.s32.totalorder %v143, 0
    %vm146 = vmand %vm145, %vm144
    %v147 = vadd.s32 %v143, 3
    %v148 = vsel %vm146, %v147, %v143
    %149 = vrot.lane.b32.xlu0 %v148, 48
    %v150 = vpop.permute.xlu0 %149
    %vm151 = vcmp.eq.s32.totalorder %v130, %v150
    %v152 = vsel %vm151, 1, 0
    %v153 = vcvt.s32.f32 %v152
    %155 = vrot.lane.b32.xlu0 %v153, 80
    %v156 = vpop.permute.xlu0 %155
    %v158 = vmul.f32 %v38, %v156
    %vm159 = vcmask 189440
    %160 = vst.msk [vmem:[#allocation7] sm:$0x3] %vm159, %v158
    // Predicated region
    $region18: #{tpu_custom_call.1} parent=1 // pred_check
      _
    $region19: #{tpu_custom_call.1} parent=1 // pred_check_branch
      %162 = sbr.rel (0) target = $region21
    $region20: #{tpu_custom_call.1} parent=1 // pred_region
      %s164 = ssub.s32 32, 32
      %165 = vsyncadd [#allocation4], %s164
      %s167 = sshll.u32 [#allocation7], 4
      %s168 = int_to_ptr.vmem [resolvable:$true] %s167
      %170 = dma.vmem_to_hbm [thread:$0]  %s168, 32, %s2, [#allocation4]
    $region21: #{tpu_custom_call.1} parent=1 // pred_fallthru
      _
    // Predicated region
    $region22: #{tpu_custom_call.1} parent=1 // pred_check
      _
    $region23: #{tpu_custom_call.1} parent=1 // pred_check_branch
      %172 = sbr.rel (0) target = $region25
    $region24: #{tpu_custom_call.1} parent=1 // pred_region
      %173 = dma.done [#allocation4], 32
    $region25: #{tpu_custom_call.1} parent=1 // pred_fallthru
      _
    %174 = vsyncpa [#allocation3], 1
    %175 = vsyncpa [#allocation6], 1
    %176 = vsyncpa [#allocation4], 1

</llo_original>
